<compile_context>
chip_gen: v6e
topology: v6e:2x2x1
jax: 0.10.0
libtpu: 0.0.40
codegen_flags: <defaults>
</compile_context>

<pallas_src>
import functools

import jax
import jax.numpy as jnp
from jax.experimental import pallas as pl
from jax.experimental.pallas import tpu as pltpu

_TB_MAX = 512  # max batch-tile rows; 512x128xf32 = 256 KiB/tile, fits all gens


def _linear_relu_kernel(x_ref, w_ref, b_ref, o_ref):
    # x_ref: (TB, IN), w_ref: (IN, OUT), b_ref: (1, OUT), o_ref: (TB, OUT)
    y = jnp.dot(x_ref[...], w_ref[...], preferred_element_type=jnp.float32)
    y = y + b_ref[...]                        # broadcast bias over batch rows
    o_ref[...] = jnp.maximum(y, 0.0).astype(o_ref.dtype)


def _round_up(n: int, m: int) -> int:
    return ((n + m - 1) // m) * m


def _fused_linear_relu(x_pad: jax.Array, w: jax.Array, b2: jax.Array,
                       tb: int) -> jax.Array:
    """ReLU(x_pad @ w + b) with the batch axis tiled into TB-row blocks."""
    B, IN = x_pad.shape
    IN2, OUT = w.shape
    assert IN == IN2 and B % tb == 0
    return pl.pallas_call(
        _linear_relu_kernel,
        out_shape=jax.ShapeDtypeStruct((B, OUT), x_pad.dtype),
        grid=(B // tb,),
        in_specs=[
            pl.BlockSpec((tb, IN), lambda i: (i, 0)),    # streamed x tiles
            pl.BlockSpec((IN, OUT), lambda i: (0, 0)),   # W resident in VMEM
            pl.BlockSpec((1, OUT), lambda i: (0, 0)),    # b resident in VMEM
        ],
        out_specs=pl.BlockSpec((tb, OUT), lambda i: (i, 0)),
        compiler_params=pltpu.CompilerParams(
            dimension_semantics=("parallel",)),          # megacore on v7x
    )(x_pad, w, b2)


@jax.jit
def _apply_module_fused(xs, w, b):
    """Fused ApplyModule.forward: one kernel over the concatenated batch."""
    sizes = [int(x.shape[0]) for x in xs]                # static at trace time
    total = sum(sizes)
    x_cat = jnp.concatenate(xs, axis=0)

    # Pad ΣB to a clean multiple of 8 (sublane) and of the batch tile.
    pad_total = _round_up(total, 8)
    if pad_total <= _TB_MAX:
        tb = pad_total
    else:
        tb = _TB_MAX
        pad_total = _round_up(pad_total, tb)
    if pad_total != total:
        x_cat = jnp.pad(x_cat, ((0, pad_total - total), (0, 0)))

    out = _fused_linear_relu(x_cat, w, b.reshape(1, -1), tb)

    # Split back to the original list structure (padding rows dropped).
    outs, off = [], 0
    for s in sizes:
        outs.append(out[off:off + s])
        off += s
    return tuple(outs)


def apply_module_forward(inputs, w, b):
    """ApplyModule.forward: apply the same sub-network to every list element."""
    assert isinstance(inputs, (list, tuple))   # mirrors the is_check assert
    return list(_apply_module_fused(tuple(inputs), w, b))


if __name__ == "__main__":
    IN_FEATURES, OUT_FEATURES = 128, 8

    key = jax.random.PRNGKey(0)
    k_w, k_b, k_x0, k_x1, k_x2 = jax.random.split(key, 5)

    # Deterministic synthetic parameters (Linear(128, 8)).
    w = jax.random.normal(k_w, (IN_FEATURES, OUT_FEATURES), jnp.float32) * 0.05
    b = jax.random.normal(k_b, (OUT_FEATURES,), jnp.float32) * 0.05

    # A small list of input tensors (different batch sizes, same feature dim).
    xs = [
        jax.random.normal(k_x0, (2, IN_FEATURES), jnp.float32),
        jax.random.normal(k_x1, (4, IN_FEATURES), jnp.float32),
        jax.random.normal(k_x2, (8, IN_FEATURES), jnp.float32),
    ]

    outs = apply_module_forward(xs, w, b)
    outs = [jax.block_until_ready(o) for o in outs]

    # Reference check against plain JAX.
    for x, o in zip(xs, outs):
        ref = jnp.maximum(x @ w + b, 0.0)
        assert o.shape == ref.shape
        assert jnp.allclose(o, ref, atol=1e-5, rtol=1e-5)

    print("KERNEL_OK")
</pallas_src>

<mosaic_0001>
module attributes {stable_mosaic.version = 11 : i64} {
  func.func @_linear_relu_kernel(%arg0: i32, %arg1: memref<16x128xf32, #tpu.memory_space<vmem>>, %arg2: memref<128x8xf32, #tpu.memory_space<vmem>>, %arg3: memref<1x8xf32, #tpu.memory_space<vmem>>, %arg4: memref<16x8xf32, #tpu.memory_space<vmem>>) attributes {dimension_semantics = [#tpu.dimension_semantics<parallel>], iteration_bounds = array<i64: 1>, scalar_prefetch = 0 : i64, scratch_operands = 0 : i64, tpu.core_type = #tpu.core_type<tc>, window_params = [{transform_indices = @transform_0, window_bounds = array<i64: 16, 128>}, {pipeline_mode = #tpu.pipeline_mode<synchronous>, transform_indices = @transform_1, window_bounds = array<i64: 128, 8>}, {pipeline_mode = #tpu.pipeline_mode<synchronous>, transform_indices = @transform_2, window_bounds = array<i64: 1, 8>}, {transform_indices = @transform_3, window_bounds = array<i64: 16, 8>}]} {
    %c0 = arith.constant 0 : index
    %c0_0 = arith.constant 0 : index
    %0 = vector.load %arg1[%c0, %c0_0] : memref<16x128xf32, #tpu.memory_space<vmem>>, vector<16x128xf32>
    %c0_1 = arith.constant 0 : index
    %c0_2 = arith.constant 0 : index
    %1 = vector.load %arg2[%c0_1, %c0_2] : memref<128x8xf32, #tpu.memory_space<vmem>>, vector<128x8xf32>
    %cst = arith.constant dense<0.000000e+00> : vector<16x8xf32>
    %2 = tpu.matmul %0, %1, %cst {dimension_numbers = #tpu.dot_dimension_numbers<[1], [0], [0], [1], [0, 0, 1, 1], [], []>} : vector<16x128xf32>, vector<128x8xf32>, vector<16x8xf32> -> vector<16x8xf32>
    %c0_3 = arith.constant 0 : index
    %c0_4 = arith.constant 0 : index
    %3 = vector.load %arg3[%c0_3, %c0_4] : memref<1x8xf32, #tpu.memory_space<vmem>>, vector<1x8xf32>
    %4 = vector.broadcast %3 : vector<1x8xf32> to vector<16x8xf32>
    %5 = arith.addf %2, %4 : vector<16x8xf32>
    %cst_5 = arith.constant 0.000000e+00 : f32
    %6 = vector.broadcast %cst_5 : f32 to vector<16x8xf32>
    %7 = arith.maximumf %5, %6 : vector<16x8xf32>
    %c0_6 = arith.constant 0 : index
    %c0_7 = arith.constant 0 : index
    %8 = vector.load %arg4[%c0_6, %c0_7] : memref<16x8xf32, #tpu.memory_space<vmem>>, vector<16x8xf32>
    tpu.vector_store %arg4[%c0_6, %c0_7], %7 {strides = array<i32>} : memref<16x8xf32, #tpu.memory_space<vmem>>, vector<16x8xf32>,
    return
  }
  func.func @transform_0(%arg0: i32) -> (i32, i32) {
    %c0_i32 = arith.constant 0 : i32
    %c0_i32_0 = arith.constant 0 : i32
    return %arg0, %c0_i32 : i32, i32
  }
  func.func @transform_1(%arg0: i32) -> (i32, i32) {
    %c0_i32 = arith.constant 0 : i32
    %c0_i32_0 = arith.constant 0 : i32
    %c0_i32_1 = arith.constant 0 : i32
    return %c0_i32, %c0_i32_0 : i32, i32
  }
  func.func @transform_2(%arg0: i32) -> (i32, i32) {
    %c0_i32 = arith.constant 0 : i32
    %c0_i32_0 = arith.constant 0 : i32
    %c0_i32_1 = arith.constant 0 : i32
    return %c0_i32, %c0_i32_0 : i32, i32
  }
  func.func @transform_3(%arg0: i32) -> (i32, i32) {
    %c0_i32 = arith.constant 0 : i32
    %c0_i32_0 = arith.constant 0 : i32
    return %arg0, %c0_i32 : i32, i32
  }
}

</mosaic_0001>

<llo_original>
// kernel: _apply_module_fused.1
$region0: #{_apply_module_fused.1}
  #allocation0 [shape = 'u32[]', space=smem, size = 0x4, offset = 0x4, fixed_abs, tag = 'smem constant byte address 0x4 - core index']
  #allocation1 [shape = 'u32[144,128]{1,0:T(1,128)}', space=vmem, size = 0x12000, scoped, tag = 'internal scratch']
  %s0 = inlined_call_operand.vmem [shape: f32[16,128], index: 0, kind: input, shape index: {}]
  %s1 = inlined_call_operand.vmem [shape: f32[128,8], index: 1, kind: input, shape index: {}]
  %s2 = inlined_call_operand.vmem [shape: f32[1,8], index: 2, kind: input, shape index: {}]
  %s3 = inlined_call_operand.vmem [shape: f32[16,8], index: 3, kind: output, shape index: {}]
  %s4 = sld [smem:[#allocation0]]
  $region22: #{_apply_module_fused.1} parent=0
    _
  %s6 = ssub.s32 1, %s4
  %s7 = scalar_select 0, %s6, %s4
  // Predicated region
  $region2: #{_apply_module_fused.1} parent=0 // pred_check
    _
  $region3: #{_apply_module_fused.1} parent=0 // pred_check_branch
    %9 = sbr.rel (0) target = $region5
  $region4: #{_apply_module_fused.1} parent=0 // pred_region
    _
  $region5: #{_apply_module_fused.1} parent=0 // pred_fallthru
    _
  // Predicated region
  $region6: #{_apply_module_fused.1} parent=0 // pred_check
    _
  $region7: #{_apply_module_fused.1} parent=0 // pred_check_branch
    %11 = sbr.rel (0) target = $region9
  $region8: #{_apply_module_fused.1} parent=0 // pred_region
    _
  $region9: #{_apply_module_fused.1} parent=0 // pred_fallthru
    _
  // Predicated region
  $region10: #{_apply_module_fused.1} parent=0 // pred_check
    _
  $region11: #{_apply_module_fused.1} parent=0 // pred_check_branch
    %13 = sbr.rel (0) target = $region13
  $region12: #{_apply_module_fused.1} parent=0 // pred_region
    _
  $region13: #{_apply_module_fused.1} parent=0 // pred_fallthru
    _
  %v14 = vld [vmem:[%s0] sm:$0xff]
  %v15 = vld [vmem:[%s0 + $0x8] sm:$0xff]
  %v16 = vld [vmem:[%s1] sm:$0xff]
  %v17 = vld [vmem:[%s1 + $0x8] sm:$0xff]
  %v18 = vld [vmem:[%s1 + $0x10] sm:$0xff]
  %v19 = vld [vmem:[%s1 + $0x18] sm:$0xff]
  %v20 = vld [vmem:[%s1 + $0x20] sm:$0xff]
  %v21 = vld [vmem:[%s1 + $0x28] sm:$0xff]
  %v22 = vld [vmem:[%s1 + $0x30] sm:$0xff]
  %v23 = vld [vmem:[%s1 + $0x38] sm:$0xff]
  %v24 = vld [vmem:[%s1 + $0x40] sm:$0xff]
  %v25 = vld [vmem:[%s1 + $0x48] sm:$0xff]
  %v26 = vld [vmem:[%s1 + $0x50] sm:$0xff]
  %v27 = vld [vmem:[%s1 + $0x58] sm:$0xff]
  %v28 = vld [vmem:[%s1 + $0x60] sm:$0xff]
  %v29 = vld [vmem:[%s1 + $0x68] sm:$0xff]
  %v30 = vld [vmem:[%s1 + $0x70] sm:$0xff]
  %v31 = vld [vmem:[%s1 + $0x78] sm:$0xff]
  %v32 = vld [vmem:[%s2] sm:$0x1]
  %v34 = vlaneseq
  %v35 = vshrl.u32 %v34, 7
  %v36 = vsub.s32 0, %v35
  %v37 = vrot.slane %v32, %v36
  %39 = vmatprep.subr.mxu0 0.0
  %40 = vmatpush1.msra.mxu0 %v31
  %41 = vmatprep.subr.mxu0 0.0
  %42 = vmatpush1.msra.mxu0 %v30
  %43 = vmatprep.subr.mxu0 0.0
  %44 = vmatpush1.msra.mxu0 %v29
  %45 = vmatprep.subr.mxu0 0.0
  %46 = vmatpush1.msra.mxu0 %v28
  %47 = vmatprep.subr.mxu0 0.0
  %48 = vmatpush1.msra.mxu0 %v27
  %49 = vmatprep.subr.mxu0 0.0
  %50 = vmatpush1.msra.mxu0 %v26
  %51 = vmatprep.subr.mxu0 0.0
  %52 = vmatpush1.msra.mxu0 %v25
  %53 = vmatprep.subr.mxu0 0.0
  %54 = vmatpush1.msra.mxu0 %v24
  %55 = vmatprep.subr.mxu0 0.0
  %56 = vmatpush1.msra.mxu0 %v23
  %57 = vmatprep.subr.mxu0 0.0
  %58 = vmatpush1.msra.mxu0 %v22
  %59 = vmatprep.subr.mxu0 0.0
  %60 = vmatpush1.msra.mxu0 %v21
  %61 = vmatprep.subr.mxu0 0.0
  %62 = vmatpush1.msra.mxu0 %v20
  %63 = vmatprep.subr.mxu0 0.0
  %64 = vmatpush1.msra.mxu0 %v19
  %65 = vmatprep.subr.mxu0 0.0
  %66 = vmatpush1.msra.mxu0 %v18
  %67 = vmatprep.subr.mxu0 0.0
  %68 = vmatpush1.msra.mxu0 %v17
  %69 = vmatprep.subr.mxu0 0.0
  %70 = vmatpush1.msra.mxu0 %v16
  %71 = vmatprep.subr.mxu0 0.0
  %72 = vmatpush2.msra.mxu0 0.0
  %73 = vmatprep.subr.mxu0 0.0
  %74 = vmatpush2.msra.mxu0 0.0
  %75 = vmatprep.subr.mxu0 0.0
  %76 = vmatpush2.msra.mxu0 0.0
  %77 = vmatprep.subr.mxu0 0.0
  %78 = vmatpush2.msra.mxu0 0.0
  %79 = vmatprep.subr.mxu0 0.0
  %80 = vmatpush2.msra.mxu0 0.0
  %81 = vmatprep.subr.mxu0 0.0
  %82 = vmatpush2.msra.mxu0 0.0
  %83 = vmatprep.subr.mxu0 0.0
  %84 = vmatpush2.msra.mxu0 0.0
  %85 = vmatprep.subr.mxu0 0.0
  %86 = vmatpush2.msra.mxu0 0.0
  %87 = vmatprep.subr.mxu0 0.0
  %88 = vmatpush2.msra.mxu0 0.0
  %89 = vmatprep.subr.mxu0 0.0
  %90 = vmatpush2.msra.mxu0 0.0
  %91 = vmatprep.subr.mxu0 0.0
  %92 = vmatpush2.msra.mxu0 0.0
  %93 = vmatprep.subr.mxu0 0.0
  %94 = vmatpush2.msra.mxu0 0.0
  %95 = vmatprep.subr.mxu0 0.0
  %96 = vmatpush2.msra.mxu0 0.0
  %97 = vmatprep.subr.mxu0 0.0
  %98 = vmatpush2.msra.mxu0 0.0
  %99 = vmatprep.subr.mxu0 0.0
  %100 = vmatpush2.msra.mxu0 0.0
  %101 = vmatprep.subr.mxu0 0.0
  %102 = vmatpush2.msra.mxu0 0.0
  %103 = vmatprep.mubr.f32.mxu0 0.0
  %104 = vmatmul.mubr.f32.gmra.mxu0 %v14
  %v105 = vpop.f32.mrf.mxu0
  %v106 = vadd.f32 %v37, %v105
  %v107 = vpop.f32.mrf.mxu0
  %108 = vmatprep.mubr.f32.mxu0 0.0
  %109 = vmatmul.mubr.f32.gmra.mxu0 %v15
  %v110 = vpop.f32.mrf.mxu0
  %v111 = vadd.f32 %v37, %v110
  %v112 = vpop.f32.mrf.mxu0
  %113 = vdwg.mxu0
  %v114 = vmax.f32 %v106, 0.0
  %v115 = vmax.f32 %v111, 0.0
  %vm116 = vcmask 64512
  %117 = vst.msk [vmem:[%s3] sm:$0xff] %vm116, %v114
  %118 = vst.msk [vmem:[%s3 + $0x8] sm:$0xff] %vm116, %v115
  // Predicated region
  $region14: #{_apply_module_fused.1} parent=0 // pred_check
    _
  $region15: #{_apply_module_fused.1} parent=0 // pred_check_branch
    %120 = sbr.rel (0) target = $region17
  $region16: #{_apply_module_fused.1} parent=0 // pred_region
    _
  $region17: #{_apply_module_fused.1} parent=0 // pred_fallthru
    _
  // Predicated region
  $region18: #{_apply_module_fused.1} parent=0 // pred_check
    _
  $region19: #{_apply_module_fused.1} parent=0 // pred_check_branch
    %122 = sbr.rel (0) target = $region21
  $region20: #{_apply_module_fused.1} parent=0 // pred_region
    _
  $region21: #{_apply_module_fused.1} parent=0 // pred_fallthru
    _

</llo_original>
